<compile_context>
chip_gen: v6e
topology: v6e:2x2x1
jax: 0.10.0
libtpu: 0.0.40
codegen_flags: <defaults>
</compile_context>

<pallas_src>
import numpy as np
import jax
import jax.numpy as jnp
from jax import lax
from jax.experimental import pallas as pl
from jax.experimental.pallas import tpu as pltpu

_BN_EPS = 1e-5


def _mlp_kernel(x_ref, w1_ref, gamma_ref, beta_ref, w2_ref, b2_ref, o_ref):
    # x_ref: (B, D)   w1_ref: (D, H)   gamma/beta: (1, H)
    # w2_ref: (H, P)  b2_ref: (1, P)   o_ref: (B, P)
    x = x_ref[...]
    B = x.shape[0]

    # Linear 1 (MXU).  b1 omitted: cancelled by BN mean subtraction.
    h = jnp.dot(x, w1_ref[...], preferred_element_type=jnp.float32)

    # Batch statistics via MXU (ones-row matmul) instead of XLU sublane reduce.
    ones_row = jnp.ones((1, B), dtype=jnp.float32)
    sums = jnp.dot(ones_row, h, preferred_element_type=jnp.float32)        # (1, H)
    sumsq = jnp.dot(ones_row, h * h, preferred_element_type=jnp.float32)   # (1, H)
    inv_b = 1.0 / B
    mean = sums * inv_b
    var = jnp.maximum(sumsq * inv_b - mean * mean, 0.0)  # guard fp cancellation
    inv_std = lax.rsqrt(var + _BN_EPS)

    # Fold BN affine into one scale/shift, fuse with ReLU.
    scale = inv_std * gamma_ref[...]          # (1, H)
    shift = beta_ref[...] - mean * scale      # (1, H)
    hr = jnp.maximum(h * scale + shift, 0.0)  # (B, H)

    # Linear 2 (MXU).
    out = jnp.dot(hr, w2_ref[...], preferred_element_type=jnp.float32) + b2_ref[...]
    o_ref[...] = out.astype(o_ref.dtype)


def mlp_forward(x, w1, b1, gamma, beta, w2, b2):
    """Fused MLP forward (training-mode BN). x: (B, D) f32. Returns (B, P).

    b1 is accepted for API parity with the PyTorch module but is not passed to
    the kernel: training-mode BatchNorm cancels it exactly.
    """
    del b1  # mathematically cancelled by BN mean subtraction
    B, D = x.shape
    H = w1.shape[1]
    P = w2.shape[1]

    # Per-feature params as (1, F) rows -> clean lane-major VMEM tiles.
    gamma = gamma.reshape(1, H)
    beta = beta.reshape(1, H)
    b2 = b2.reshape(1, P)

    vmem = pl.BlockSpec(memory_space=pltpu.MemorySpace.VMEM)
    return pl.pallas_call(
        _mlp_kernel,
        out_shape=jax.ShapeDtypeStruct((B, P), x.dtype),
        in_specs=[vmem, vmem, vmem, vmem, vmem, vmem],
        out_specs=vmem,
    )(x, w1, gamma, beta, w2, b2)


def _reference(x, w1, b1, gamma, beta, w2, b2):
    """Pure-JAX reference with PyTorch training-mode BN semantics (b1 applied)."""
    h = jnp.dot(x, w1, precision=lax.Precision.HIGHEST) + b1[None, :]
    mean = jnp.mean(h, axis=0, keepdims=True)
    var = jnp.mean((h - mean) ** 2, axis=0, keepdims=True)
    hn = (h - mean) / jnp.sqrt(var + _BN_EPS) * gamma[None, :] + beta[None, :]
    hr = jnp.maximum(hn, 0.0)
    return jnp.dot(hr, w2, precision=lax.Precision.HIGHEST) + b2[None, :]


if __name__ == "__main__":
    key = jax.random.PRNGKey(0)
    kx, kw1, kb1, kg, kbt, kw2, kb2 = jax.random.split(key, 7)

    # MLP(dim=128, projection_size=128, hidden_size=256); batch = 128.
    # All dims are multiples of (8, 128) -> aligned, lane-dense tiles.
    B, D, H, P = 128, 128, 256, 128

    x = jax.random.normal(kx, (B, D), dtype=jnp.float32)

    # PyTorch-style Linear init: U(-1/sqrt(fan_in), 1/sqrt(fan_in)).
    w1 = jax.random.uniform(kw1, (D, H), jnp.float32, -1.0, 1.0) / np.sqrt(D)
    b1 = jax.random.uniform(kb1, (H,), jnp.float32, -1.0, 1.0) / np.sqrt(D)
    w2 = jax.random.uniform(kw2, (H, P), jnp.float32, -1.0, 1.0) / np.sqrt(H)
    b2 = jax.random.uniform(kb2, (P,), jnp.float32, -1.0, 1.0) / np.sqrt(H)

    # BatchNorm affine params (perturbed from 1/0 defaults to exercise the math).
    gamma = 1.0 + 0.1 * jax.random.normal(kg, (H,), jnp.float32)
    beta = 0.1 * jax.random.normal(kbt, (H,), jnp.float32)

    out = mlp_forward(x, w1, b1, gamma, beta, w2, b2)
    out = jax.block_until_ready(out)

    ref = _reference(x, w1, b1, gamma, beta, w2, b2)
    np.testing.assert_allclose(np.asarray(out), np.asarray(ref), rtol=2e-3, atol=2e-3)

    print("KERNEL_OK")
</pallas_src>

<mosaic_0001>
module attributes {stable_mosaic.version = 11 : i64} {
  func.func @_mlp_kernel(%arg0: memref<128x128xf32, #tpu.memory_space<vmem>>, %arg1: memref<128x256xf32, #tpu.memory_space<vmem>>, %arg2: memref<1x256xf32, #tpu.memory_space<vmem>>, %arg3: memref<1x256xf32, #tpu.memory_space<vmem>>, %arg4: memref<256x128xf32, #tpu.memory_space<vmem>>, %arg5: memref<1x128xf32, #tpu.memory_space<vmem>>, %arg6: memref<128x128xf32, #tpu.memory_space<vmem>>) attributes {dimension_semantics = [], scalar_prefetch = 0 : i64, scratch_operands = 0 : i64, tpu.core_type = #tpu.core_type<tc>} {
    %c0 = arith.constant 0 : index
    %c0_0 = arith.constant 0 : index
    %0 = vector.load %arg0[%c0, %c0_0] : memref<128x128xf32, #tpu.memory_space<vmem>>, vector<128x128xf32>
    %c0_1 = arith.constant 0 : index
    %c0_2 = arith.constant 0 : index
    %1 = vector.load %arg1[%c0_1, %c0_2] : memref<128x256xf32, #tpu.memory_space<vmem>>, vector<128x256xf32>
    %cst = arith.constant dense<0.000000e+00> : vector<128x256xf32>
    %2 = tpu.matmul %0, %1, %cst {dimension_numbers = #tpu.dot_dimension_numbers<[1], [0], [0], [1], [0, 0, 1, 1], [], []>} : vector<128x128xf32>, vector<128x256xf32>, vector<128x256xf32> -> vector<128x256xf32>
    %cst_3 = arith.constant 1.000000e+00 : f32
    %3 = vector.broadcast %cst_3 : f32 to vector<1x128xf32>
    %cst_4 = arith.constant dense<0.000000e+00> : vector<1x256xf32>
    %4 = tpu.matmul %3, %2, %cst_4 {dimension_numbers = #tpu.dot_dimension_numbers<[1], [0], [0], [1], [0, 0, 1, 1], [], []>} : vector<1x128xf32>, vector<128x256xf32>, vector<1x256xf32> -> vector<1x256xf32>
    %5 = arith.mulf %2, %2 : vector<128x256xf32>
    %cst_5 = arith.constant dense<0.000000e+00> : vector<1x256xf32>
    %6 = tpu.matmul %3, %5, %cst_5 {dimension_numbers = #tpu.dot_dimension_numbers<[1], [0], [0], [1], [0, 0, 1, 1], [], []>} : vector<1x128xf32>, vector<128x256xf32>, vector<1x256xf32> -> vector<1x256xf32>
    %cst_6 = arith.constant 7.812500e-03 : f32
    %7 = vector.broadcast %cst_6 : f32 to vector<1x256xf32>
    %8 = arith.mulf %4, %7 : vector<1x256xf32>
    %cst_7 = arith.constant 7.812500e-03 : f32
    %9 = vector.broadcast %cst_7 : f32 to vector<1x256xf32>
    %10 = arith.mulf %6, %9 : vector<1x256xf32>
    %11 = arith.mulf %8, %8 : vector<1x256xf32>
    %12 = arith.subf %10, %11 : vector<1x256xf32>
    %cst_8 = arith.constant 0.000000e+00 : f32
    %13 = vector.broadcast %cst_8 : f32 to vector<1x256xf32>
    %14 = arith.maximumf %12, %13 : vector<1x256xf32>
    %cst_9 = arith.constant 9.99999974E-6 : f32
    %15 = vector.broadcast %cst_9 : f32 to vector<1x256xf32>
    %16 = arith.addf %14, %15 : vector<1x256xf32>
    %17 = math.rsqrt %16 : vector<1x256xf32>
    %c0_10 = arith.constant 0 : index
    %c0_11 = arith.constant 0 : index
    %18 = vector.load %arg2[%c0_10, %c0_11] : memref<1x256xf32, #tpu.memory_space<vmem>>, vector<1x256xf32>
    %19 = arith.mulf %17, %18 : vector<1x256xf32>
    %c0_12 = arith.constant 0 : index
    %c0_13 = arith.constant 0 : index
    %20 = vector.load %arg3[%c0_12, %c0_13] : memref<1x256xf32, #tpu.memory_space<vmem>>, vector<1x256xf32>
    %21 = arith.mulf %8, %19 : vector<1x256xf32>
    %22 = arith.subf %20, %21 : vector<1x256xf32>
    %23 = vector.broadcast %19 : vector<1x256xf32> to vector<128x256xf32>
    %24 = arith.mulf %2, %23 : vector<128x256xf32>
    %25 = vector.broadcast %22 : vector<1x256xf32> to vector<128x256xf32>
    %26 = arith.addf %24, %25 : vector<128x256xf32>
    %cst_14 = arith.constant 0.000000e+00 : f32
    %27 = vector.broadcast %cst_14 : f32 to vector<128x256xf32>
    %28 = arith.maximumf %26, %27 : vector<128x256xf32>
    %c0_15 = arith.constant 0 : index
    %c0_16 = arith.constant 0 : index
    %29 = vector.load %arg4[%c0_15, %c0_16] : memref<256x128xf32, #tpu.memory_space<vmem>>, vector<256x128xf32>
    %cst_17 = arith.constant dense<0.000000e+00> : vector<128x128xf32>
    %30 = tpu.matmul %28, %29, %cst_17 {dimension_numbers = #tpu.dot_dimension_numbers<[1], [0], [0], [1], [0, 0, 1, 1], [], []>} : vector<128x256xf32>, vector<256x128xf32>, vector<128x128xf32> -> vector<128x128xf32>
    %c0_18 = arith.constant 0 : index
    %c0_19 = arith.constant 0 : index
    %31 = vector.load %arg5[%c0_18, %c0_19] : memref<1x128xf32, #tpu.memory_space<vmem>>, vector<1x128xf32>
    %32 = vector.broadcast %31 : vector<1x128xf32> to vector<128x128xf32>
    %33 = arith.addf %30, %32 : vector<128x128xf32>
    %c0_20 = arith.constant 0 : index
    %c0_21 = arith.constant 0 : index
    %34 = vector.load %arg6[%c0_20, %c0_21] : memref<128x128xf32, #tpu.memory_space<vmem>>, vector<128x128xf32>
    tpu.vector_store %arg6[%c0_20, %c0_21], %33 {strides = array<i32>} : memref<128x128xf32, #tpu.memory_space<vmem>>, vector<128x128xf32>,
    return
  }
}

</mosaic_0001>

<llo_original>
// kernel: tpu_custom_call.1
$region0: #{tpu_custom_call.1}
  #allocation0 [shape = 'u32[]', space=smem, size = 0x4, offset = 0x4, fixed_abs, tag = 'smem constant byte address 0x4 - core index']
  #allocation1 [shape = 'u32[144,128]{1,0:T(1,128)}', space=vmem, size = 0x12000, scoped, tag = 'internal scratch']
  %s0 = inlined_call_operand.hbm [shape: f32[128,128], index: 0, kind: input, shape index: {}]
  %s1 = inlined_call_operand.hbm [shape: f32[128,256], index: 1, kind: input, shape index: {}]
  %s2 = inlined_call_operand.vmem [shape: f32[1,256], index: 2, kind: input, shape index: {}]
  %s3 = inlined_call_operand.vmem [shape: f32[1,256], index: 3, kind: input, shape index: {}]
  %s4 = inlined_call_operand.hbm [shape: f32[256,128], index: 4, kind: input, shape index: {}]
  %s5 = inlined_call_operand.vmem [shape: f32[1,128], index: 5, kind: input, shape index: {}]
  %s6 = inlined_call_operand.hbm [shape: f32[128,128], index: 6, kind: output, shape index: {}]
  %s7 = sld [smem:[#allocation0]]
  $region46: #{tpu_custom_call.1} parent=0
    _
  %s9 = ssub.s32 1, %s7
  %s10 = scalar_select 0, %s9, %s7
  $region1: #{tpu_custom_call.1} parent=0
    #allocation2 [shape = 'u8[65536]{0}', space=vmem, size = 0x10000, scoped, tag = 'input window, operand 0, single buffered']
    #allocation3 [shape = 's32[1]{0}', space=sflag, size = 0x4, scoped, tag = 'scoped memory for tpu_custom_call.1']
    #allocation4 [shape = 's32[1]{0}', space=sflag, size = 0x4, scoped, tag = 'scoped memory for tpu_custom_call.1']
    #allocation5 [shape = 'u8[131072]{0}', space=vmem, size = 0x20000, scoped, tag = 'input window, operand 1, single buffered']
    #allocation6 [shape = 's32[1]{0}', space=sflag, size = 0x4, scoped, tag = 'scoped memory for tpu_custom_call.1']
    #allocation7 [shape = 'u8[131072]{0}', space=vmem, size = 0x20000, scoped, tag = 'input window, operand 4, single buffered']
    #allocation8 [shape = 'u8[65536]{0}', space=vmem, size = 0x10000, scoped, tag = 'output window, operand 0, single buffered']
    %11 = vsyncpa [#allocation3], 0
    %12 = vsyncpa [#allocation6], 0
    %13 = vsyncpa [#allocation4], 0
    // Predicated region
    $region2: #{tpu_custom_call.1} parent=1 // pred_check
      _
    $region3: #{tpu_custom_call.1} parent=1 // pred_check_branch
      %15 = sbr.rel (0) target = $region5
    $region4: #{tpu_custom_call.1} parent=1 // pred_region
      %s17 = ssub.s32 2048, 2048
      %18 = vsyncadd [#allocation3], %s17
      %s19 = sshll.u32 [#allocation2], 4
      %s20 = int_to_ptr.vmem [resolvable:$true] %s19
      %25 = dma.hbm_to_vmem [thread:$0]  %s0, 2048, %s20, [#allocation3], 128, 128, 8
    $region5: #{tpu_custom_call.1} parent=1 // pred_fallthru
      _
    // Predicated region
    $region6: #{tpu_custom_call.1} parent=1 // pred_check
      _
    $region7: #{tpu_custom_call.1} parent=1 // pred_check_branch
      %27 = sbr.rel (0) target = $region9
    $region8: #{tpu_custom_call.1} parent=1 // pred_region
      %s29 = ssub.s32 4096, 4096
      %30 = vsyncadd [#allocation6], %s29
      %s31 = sshll.u32 [#allocation5], 4
      %s32 = int_to_ptr.vmem [resolvable:$true] %s31
      %37 = dma.hbm_to_vmem [thread:$0]  %s1, 4096, %s32, [#allocation6], 256, 256, 16
    $region9: #{tpu_custom_call.1} parent=1 // pred_fallthru
      _
    // Predicated region
    $region10: #{tpu_custom_call.1} parent=1 // pred_check
      _
    $region11: #{tpu_custom_call.1} parent=1 // pred_check_branch
      %39 = sbr.rel (0) target = $region13
    $region12: #{tpu_custom_call.1} parent=1 // pred_region
      _
    $region13: #{tpu_custom_call.1} parent=1 // pred_fallthru
      _
    // Predicated region
    $region14: #{tpu_custom_call.1} parent=1 // pred_check
      _
    $region15: #{tpu_custom_call.1} parent=1 // pred_check_branch
      %41 = sbr.rel (0) target = $region17
    $region16: #{tpu_custom_call.1} parent=1 // pred_region
      _
    $region17: #{tpu_custom_call.1} parent=1 // pred_fallthru
      _
    // Predicated region
    $region18: #{tpu_custom_call.1} parent=1 // pred_check
      _
    $region19: #{tpu_custom_call.1} parent=1 // pred_check_branch
      %43 = sbr.rel (0) target = $region21
    $region20: #{tpu_custom_call.1} parent=1 // pred_region
      %s45 = ssub.s32 4096, 4096
      %46 = vsyncadd [#allocation6], %s45
      %s47 = sshll.u32 [#allocation7], 4
      %s48 = int_to_ptr.vmem [resolvable:$true] %s47
      %53 = dma.hbm_to_vmem [thread:$0]  %s4, 4096, %s48, [#allocation6], 128, 128, 8
    $region21: #{tpu_custom_call.1} parent=1 // pred_fallthru
      _
    // Predicated region
    $region22: #{tpu_custom_call.1} parent=1 // pred_check
      _
    $region23: #{tpu_custom_call.1} parent=1 // pred_check_branch
      %55 = sbr.rel (0) target = $region25
    $region24: #{tpu_custom_call.1} parent=1 // pred_region
      _
    $region25: #{tpu_custom_call.1} parent=1 // pred_fallthru
      _
    // Predicated region
    $region26: #{tpu_custom_call.1} parent=1 // pred_check
      _
    $region27: #{tpu_custom_call.1} parent=1 // pred_check_branch
      %57 = sbr.rel (0) target = $region29
    $region28: #{tpu_custom_call.1} parent=1 // pred_region
      %58 = dma.done [#allocation3], 2048
    $region29: #{tpu_custom_call.1} parent=1 // pred_fallthru
      _
    // Predicated region
    $region30: #{tpu_custom_call.1} parent=1 // pred_check
      _
    $region31: #{tpu_custom_call.1} parent=1 // pred_check_branch
      %60 = sbr.rel (0) target = $region33
    $region32: #{tpu_custom_call.1} parent=1 // pred_region
      %61 = dma.done [#allocation6], 4096
    $region33: #{tpu_custom_call.1} parent=1 // pred_fallthru
      _
    // Predicated region
    $region34: #{tpu_custom_call.1} parent=1 // pred_check
      _
    $region35: #{tpu_custom_call.1} parent=1 // pred_check_branch
      %63 = sbr.rel (0) target = $region37
    $region36: #{tpu_custom_call.1} parent=1 // pred_region
      %64 = dma.done [#allocation6], 4096
    $region37: #{tpu_custom_call.1} parent=1 // pred_fallthru
      _
    %v65 = vld [vmem:[#allocation2] sm:$0xff]
    %v66 = vld [vmem:[#allocation2 + $0x8] sm:$0xff]
    %v67 = vld [vmem:[#allocation2 + $0x10] sm:$0xff]
    %v68 = vld [vmem:[#allocation2 + $0x18] sm:$0xff]
    %v69 = vld [vmem:[#allocation2 + $0x20] sm:$0xff]
    %v70 = vld [vmem:[#allocation2 + $0x28] sm:$0xff]
    %v71 = vld [vmem:[#allocation2 + $0x30] sm:$0xff]
    %v72 = vld [vmem:[#allocation2 + $0x38] sm:$0xff]
    %v73 = vld [vmem:[#allocation2 + $0x40] sm:$0xff]
    %v74 = vld [vmem:[#allocation2 + $0x48] sm:$0xff]
    %v75 = vld [vmem:[#allocation2 + $0x50] sm:$0xff]
    %v76 = vld [vmem:[#allocation2 + $0x58] sm:$0xff]
    %v77 = vld [vmem:[#allocation2 + $0x60] sm:$0xff]
    %v78 = vld [vmem:[#allocation2 + $0x68] sm:$0xff]
    %v79 = vld [vmem:[#allocation2 + $0x70] sm:$0xff]
    %v80 = vld [vmem:[#allocation2 + $0x78] sm:$0xff]
    %v81 = vld [vmem:[#allocation5] sm:$0xff]
    %v82 = vld [vmem:[#allocation5 + $0x8] sm:$0xff]
    %v83 = vld [vmem:[#allocation5 + $0x10] sm:$0xff]
    %v84 = vld [vmem:[#allocation5 + $0x18] sm:$0xff]
    %v85 = vld [vmem:[#allocation5 + $0x20] sm:$0xff]
    %v86 = vld [vmem:[#allocation5 + $0x28] sm:$0xff]
    %v87 = vld [vmem:[#allocation5 + $0x30] sm:$0xff]
    %v88 = vld [vmem:[#allocation5 + $0x38] sm:$0xff]
    %v89 = vld [vmem:[#allocation5 + $0x40] sm:$0xff]
    %v90 = vld [vmem:[#allocation5 + $0x48] sm:$0xff]
    %v91 = vld [vmem:[#allocation5 + $0x50] sm:$0xff]
    %v92 = vld [vmem:[#allocation5 + $0x58] sm:$0xff]
    %v93 = vld [vmem:[#allocation5 + $0x60] sm:$0xff]
    %v94 = vld [vmem:[#allocation5 + $0x68] sm:$0xff]
    %v95 = vld [vmem:[#allocation5 + $0x70] sm:$0xff]
    %v96 = vld [vmem:[#allocation5 + $0x78] sm:$0xff]
    %v97 = vld [vmem:[#allocation5 + $0x80] sm:$0xff]
    %v98 = vld [vmem:[#allocation5 + $0x88] sm:$0xff]
    %v99 = vld [vmem:[#allocation5 + $0x90] sm:$0xff]
    %v100 = vld [vmem:[#allocation5 + $0x98] sm:$0xff]
    %v101 = vld [vmem:[#allocation5 + $0xa0] sm:$0xff]
    %v102 = vld [vmem:[#allocation5 + $0xa8] sm:$0xff]
    %v103 = vld [vmem:[#allocation5 + $0xb0] sm:$0xff]
    %v104 = vld [vmem:[#allocation5 + $0xb8] sm:$0xff]
    %v105 = vld [vmem:[#allocation5 + $0xc0] sm:$0xff]
    %v106 = vld [vmem:[#allocation5 + $0xc8] sm:$0xff]
    %v107 = vld [vmem:[#allocation5 + $0xd0] sm:$0xff]
    %v108 = vld [vmem:[#allocation5 + $0xd8] sm:$0xff]
    %v109 = vld [vmem:[#allocation5 + $0xe0] sm:$0xff]
    %v110 = vld [vmem:[#allocation5 + $0xe8] sm:$0xff]
    %v111 = vld [vmem:[#allocation5 + $0xf0] sm:$0xff]
    %v112 = vld [vmem:[#allocation5 + $0xf8] sm:$0xff]
    %113 = vmatprep.subr.mxu0 %v112
    %114 = vmatpush1.msra.mxu0 %v111
    %115 = vmatprep.subr.mxu0 %v110
    %116 = vmatpush1.msra.mxu0 %v109
    %117 = vmatprep.subr.mxu0 %v108
    %118 = vmatpush1.msra.mxu0 %v107
    %119 = vmatprep.subr.mxu0 %v106
    %120 = vmatpush1.msra.mxu0 %v105
    %121 = vmatprep.subr.mxu0 %v104
    %122 = vmatpush1.msra.mxu0 %v103
    %123 = vmatprep.subr.mxu0 %v102
    %124 = vmatpush1.msra.mxu0 %v101
    %125 = vmatprep.subr.mxu0 %v100
    %126 = vmatpush1.msra.mxu0 %v99
    %127 = vmatprep.subr.mxu0 %v98
    %128 = vmatpush1.msra.mxu0 %v97
    %129 = vmatprep.subr.mxu0 %v96
    %130 = vmatpush1.msra.mxu0 %v95
    %131 = vmatprep.subr.mxu0 %v94
    %132 = vmatpush1.msra.mxu0 %v93
    %133 = vmatprep.subr.mxu0 %v92
    %134 = vmatpush1.msra.mxu0 %v91
    %135 = vmatprep.subr.mxu0 %v90
    %136 = vmatpush1.msra.mxu0 %v89
    %137 = vmatprep.subr.mxu0 %v88
    %138 = vmatpush1.msra.mxu0 %v87
    %139 = vmatprep.subr.mxu0 %v86
    %140 = vmatpush1.msra.mxu0 %v85
    %141 = vmatprep.subr.mxu0 %v84
    %142 = vmatpush1.msra.mxu0 %v83
    %143 = vmatprep.subr.mxu0 %v82
    %144 = vmatpush1.msra.mxu0 %v81
    %145 = vmatprep.subr.mxu0 0.0
    %146 = vmatpush2.msra.mxu0 0.0
    %147 = vmatprep.subr.mxu0 0.0
    %148 = vmatpush2.msra.mxu0 0.0
    %149 = vmatprep.subr.mxu0 0.0
    %150 = vmatpush2.msra.mxu0 0.0
    %151 = vmatprep.subr.mxu0 0.0
    %152 = vmatpush2.msra.mxu0 0.0
    %153 = vmatprep.subr.mxu0 0.0
    %154 = vmatpush2.msra.mxu0 0.0
    %155 = vmatprep.subr.mxu0 0.0
    %156 = vmatpush2.msra.mxu0 0.0
    %157 = vmatprep.subr.mxu0 0.0
    %158 = vmatpush2.msra.mxu0 0.0
    %159 = vmatprep.subr.mxu0 0.0
    %160 = vmatpush2.msra.mxu0 0.0
    %161 = vmatprep.subr.mxu0 0.0
    %162 = vmatpush2.msra.mxu0 0.0
    %163 = vmatprep.subr.mxu0 0.0
    %164 = vmatpush2.msra.mxu0 0.0
    %165 = vmatprep.subr.mxu0 0.0
    %166 = vmatpush2.msra.mxu0 0.0
    %167 = vmatprep.subr.mxu0 0.0
    %168 = vmatpush2.msra.mxu0 0.0
    %169 = vmatprep.subr.mxu0 0.0
    %170 = vmatpush2.msra.mxu0 0.0
    %171 = vmatprep.subr.mxu0 0.0
    %172 = vmatpush2.msra.mxu0 0.0
    %173 = vmatprep.subr.mxu0 0.0
    %174 = vmatpush2.msra.mxu0 0.0
    %175 = vmatprep.subr.mxu0 0.0
    %176 = vmatpush2.msra.mxu0 0.0
    %177 = vmatprep.mubr.f32.mxu0 0.0
    %178 = vmatmul.mubr.f32.gmra.mxu0 %v65
    %v179 = vpop.f32.mrf.mxu0
    %v180 = vadd.f32 0.0, %v179
    %v181 = vpop.f32.mrf.mxu0
    %v182 = vadd.f32 0.0, %v181
    %183 = vmatprep.mubr.f32.mxu0 0.0
    %184 = vmatmul.mubr.f32.gmra.mxu0 %v66
    %v185 = vpop.f32.mrf.mxu0
    %v186 = vadd.f32 0.0, %v185
    %v187 = vpop.f32.mrf.mxu0
    %v188 = vadd.f32 0.0, %v187
    %189 = vmatprep.mubr.f32.mxu0 0.0
    %190 = vmatmul.mubr.f32.gmra.mxu0 %v67
    %v191 = vpop.f32.mrf.mxu0
    %v192 = vadd.f32 0.0, %v191
    %v193 = vpop.f32.mrf.mxu0
    %v194 = vadd.f32 0.0, %v193
    %195 = vmatprep.mubr.f32.mxu0 0.0
    %196 = vmatmul.mubr.f32.gmra.mxu0 %v68
    %v197 = vpop.f32.mrf.mxu0
    %v198 = vadd.f32 0.0, %v197
    %v199 = vpop.f32.mrf.mxu0
    %v200 = vadd.f32 0.0, %v199
    %201 = vmatprep.mubr.f32.mxu0 0.0
    %202 = vmatmul.mubr.f32.gmra.mxu0 %v69
    %v203 = vpop.f32.mrf.mxu0
    %v204 = vadd.f32 0.0, %v203
    %v205 = vpop.f32.mrf.mxu0
    %v206 = vadd.f32 0.0, %v205
    %207 = vmatprep.mubr.f32.mxu0 0.0
    %208 = vmatmul.mubr.f32.gmra.mxu0 %v70
    %v209 = vpop.f32.mrf.mxu0
    %v210 = vadd.f32 0.0, %v209
    %v211 = vpop.f32.mrf.mxu0
    %v212 = vadd.f32 0.0, %v211
    %213 = vmatprep.mubr.f32.mxu0 0.0
    %214 = vmatmul.mubr.f32.gmra.mxu0 %v71
    %v215 = vpop.f32.mrf.mxu0
    %v216 = vadd.f32 0.0, %v215
    %v217 = vpop.f32.mrf.mxu0
    %v218 = vadd.f32 0.0, %v217
    %219 = vmatprep.mubr.f32.mxu0 0.0
    %220 = vmatmul.mubr.f32.gmra.mxu0 %v72
    %v221 = vpop.f32.mrf.mxu0
    %v222 = vadd.f32 0.0, %v221
    %v223 = vpop.f32.mrf.mxu0
    %v224 = vadd.f32 0.0, %v223
    %225 = vmatprep.mubr.f32.mxu0 0.0
    %226 = vmatmul.mubr.f32.gmra.mxu0 %v73
    %v227 = vpop.f32.mrf.mxu0
    %v228 = vadd.f32 0.0, %v227
    %v229 = vpop.f32.mrf.mxu0
    %v230 = vadd.f32 0.0, %v229
    %231 = vmatprep.mubr.f32.mxu0 0.0
    %232 = vmatmul.mubr.f32.gmra.mxu0 %v74
    %v233 = vpop.f32.mrf.mxu0
    %v234 = vadd.f32 0.0, %v233
    %v235 = vpop.f32.mrf.mxu0
    %v236 = vadd.f32 0.0, %v235
    %237 = vmatprep.mubr.f32.mxu0 0.0
    %238 = vmatmul.mubr.f32.gmra.mxu0 %v75
    %v239 = vpop.f32.mrf.mxu0
    %v240 = vadd.f32 0.0, %v239
    %v241 = vpop.f32.mrf.mxu0
    %v242 = vadd.f32 0.0, %v241
    %243 = vmatprep.mubr.f32.mxu0 0.0
    %244 = vmatmul.mubr.f32.gmra.mxu0 %v76
    %v245 = vpop.f32.mrf.mxu0
    %v246 = vadd.f32 0.0, %v245
    %v247 = vpop.f32.mrf.mxu0
    %v248 = vadd.f32 0.0, %v247
    %249 = vmatprep.mubr.f32.mxu0 0.0
    %250 = vmatmul.mubr.f32.gmra.mxu0 %v77
    %v251 = vpop.f32.mrf.mxu0
    %v252 = vadd.f32 0.0, %v251
    %v253 = vpop.f32.mrf.mxu0
    %v254 = vadd.f32 0.0, %v253
    %255 = vmatprep.mubr.f32.mxu0 0.0
    %256 = vmatmul.mubr.f32.gmra.mxu0 %v78
    %v257 = vpop.f32.mrf.mxu0
    %v258 = vadd.f32 0.0, %v257
    %v259 = vpop.f32.mrf.mxu0
    %v260 = vadd.f32 0.0, %v259
    %261 = vmatprep.mubr.f32.mxu0 0.0
    %262 = vmatmul.mubr.f32.gmra.mxu0 %v79
    %v263 = vpop.f32.mrf.mxu0
    %v264 = vadd.f32 0.0, %v263
    %v265 = vpop.f32.mrf.mxu0
    %v266 = vadd.f32 0.0, %v265
    %267 = vmatprep.mubr.f32.mxu0 0.0
    %268 = vmatmul.mubr.f32.gmra.mxu0 %v80
    %v269 = vpop.f32.mrf.mxu0
    %v270 = vadd.f32 0.0, %v269
    %v271 = vpop.f32.mrf.mxu0
    %v272 = vadd.f32 0.0, %v271
    %273 = vdwg.mxu0
    %274 = vmatprep.subr.mxu0 %v272
    %275 = vmatpush1.msra.mxu0 %v270
    %276 = vmatprep.subr.mxu0 %v266
    %277 = vmatpush1.msra.mxu0 %v264
    %278 = vmatprep.subr.mxu0 %v260
    %279 = vmatpush1.msra.mxu0 %v258
    %280 = vmatprep.subr.mxu0 %v254
    %281 = vmatpush1.msra.mxu0 %v252
    %282 = vmatprep.subr.mxu0 %v248
    %283 = vmatpush1.msra.mxu0 %v246
    %284 = vmatprep.subr.mxu0 %v242
    %285 = vmatpush1.msra.mxu0 %v240
    %286 = vmatprep.subr.mxu0 %v236
    %287 = vmatpush1.msra.mxu0 %v234
    %288 = vmatprep.subr.mxu0 %v230
    %289 = vmatpush1.msra.mxu0 %v228
    %290 = vmatprep.subr.mxu0 %v224
    %291 = vmatpush1.msra.mxu0 %v222
    %292 = vmatprep.subr.mxu0 %v218
    %293 = vmatpush1.msra.mxu0 %v216
    %294 = vmatprep.subr.mxu0 %v212
    %295 = vmatpush1.msra.mxu0 %v210
    %296 = vmatprep.subr.mxu0 %v206
    %297 = vmatpush1.msra.mxu0 %v204
    %298 = vmatprep.subr.mxu0 %v200
    %299 = vmatpush1.msra.mxu0 %v198
    %300 = vmatprep.subr.mxu0 %v194
    %301 = vmatpush1.msra.mxu0 %v192
    %302 = vmatprep.subr.mxu0 %v188
    %303 = vmatpush1.msra.mxu0 %v186
    %304 = vmatprep.subr.mxu0 %v182
    %305 = vmatpush1.msra.mxu0 %v180
    %306 = vmatprep.subr.mxu0 0.0
    %307 = vmatpush2.msra.mxu0 0.0
    %308 = vmatprep.subr.mxu0 0.0
    %309 = vmatpush2.msra.mxu0 0.0
    %310 = vmatprep.subr.mxu0 0.0
    %311 = vmatpush2.msra.mxu0 0.0
    %312 = vmatprep.subr.mxu0 0.0
    %313 = vmatpush2.msra.mxu0 0.0
    %314 = vmatprep.subr.mxu0 0.0
    %315 = vmatpush2.msra.mxu0 0.0
    %316 = vmatprep.subr.mxu0 0.0
    %317 = vmatpush2.msra.mxu0 0.0
    %318 = vmatprep.subr.mxu0 0.0
    %319 = vmatpush2.msra.mxu0 0.0
    %320 = vmatprep.subr.mxu0 0.0
    %321 = vmatpush2.msra.mxu0 0.0
    %322 = vmatprep.subr.mxu0 0.0
    %323 = vmatpush2.msra.mxu0 0.0
    %324 = vmatprep.subr.mxu0 0.0
    %325 = vmatpush2.msra.mxu0 0.0
    %326 = vmatprep.subr.mxu0 0.0
    %327 = vmatpush2.msra.mxu0 0.0
    %328 = vmatprep.subr.mxu0 0.0
    %329 = vmatpush2.msra.mxu0 0.0
    %330 = vmatprep.subr.mxu0 0.0
    %331 = vmatpush2.msra.mxu0 0.0
    %332 = vmatprep.subr.mxu0 0.0
    %333 = vmatpush2.msra.mxu0 0.0
    %334 = vmatprep.subr.mxu0 0.0
    %335 = vmatpush2.msra.mxu0 0.0
    %336 = vmatprep.subr.mxu0 0.0
    %337 = vmatpush2.msra.mxu0 0.0
    %338 = vmatprep.mubr.f32.mxu0 0.0
    %339 = vmatmul.mubr.f32.gmra.mxu0 1.0
    %v340 = vpop.f32.mrf.mxu0
    %v341 = vadd.f32 0.0, %v340
    %v342 = vpop.f32.mrf.mxu0
    %v343 = vadd.f32 0.0, %v342
    %344 = vdwg.mxu0
    %v345 = vmul.f32 %v180, %v180
    %v346 = vmul.f32 %v182, %v182
    %v347 = vmul.f32 %v186, %v186
    %v348 = vmul.f32 %v188, %v188
    %v349 = vmul.f32 %v192, %v192
    %v350 = vmul.f32 %v194, %v194
    %v351 = vmul.f32 %v198, %v198
    %v352 = vmul.f32 %v200, %v200
    %v353 = vmul.f32 %v204, %v204
    %v354 = vmul.f32 %v206, %v206
    %v355 = vmul.f32 %v210, %v210
    %v356 = vmul.f32 %v212, %v212
    %v357 = vmul.f32 %v216, %v216
    %v358 = vmul.f32 %v218, %v218
    %v359 = vmul.f32 %v222, %v222
    %v360 = vmul.f32 %v224, %v224
    %v361 = vmul.f32 %v228, %v228
    %v362 = vmul.f32 %v230, %v230
    %v363 = vmul.f32 %v234, %v234
    %v364 = vmul.f32 %v236, %v236
    %v365 = vmul.f32 %v240, %v240
    %v366 = vmul.f32 %v242, %v242
    %v367 = vmul.f32 %v246, %v246
    %v368 = vmul.f32 %v248, %v248
    %v369 = vmul.f32 %v252, %v252
    %v370 = vmul.f32 %v254, %v254
    %v371 = vmul.f32 %v258, %v258
    %v372 = vmul.f32 %v260, %v260
    %v373 = vmul.f32 %v264, %v264
    %v374 = vmul.f32 %v266, %v266
    %v375 = vmul.f32 %v270, %v270
    %v376 = vmul.f32 %v272, %v272
    %377 = vmatprep.subr.mxu0 %v376
    %378 = vmatpush1.msra.mxu0 %v375
    %379 = vmatprep.subr.mxu0 %v374
    %380 = vmatpush1.msra.mxu0 %v373
    %381 = vmatprep.subr.mxu0 %v372
    %382 = vmatpush1.msra.mxu0 %v371
    %383 = vmatprep.subr.mxu0 %v370
    %384 = vmatpush1.msra.mxu0 %v369
    %385 = vmatprep.subr.mxu0 %v368
    %386 = vmatpush1.msra.mxu0 %v367
    %387 = vmatprep.subr.mxu0 %v366
    %388 = vmatpush1.msra.mxu0 %v365
    %389 = vmatprep.subr.mxu0 %v364
    %390 = vmatpush1.msra.mxu0 %v363
    %391 = vmatprep.subr.mxu0 %v362
    %392 = vmatpush1.msra.mxu0 %v361
    %393 = vmatprep.subr.mxu0 %v360
    %394 = vmatpush1.msra.mxu0 %v359
    %395 = vmatprep.subr.mxu0 %v358
    %396 = vmatpush1.msra.mxu0 %v357
    %397 = vmatprep.subr.mxu0 %v356
    %398 = vmatpush1.msra.mxu0 %v355
    %399 = vmatprep.subr.mxu0 %v354
    %400 = vmatpush1.msra.mxu0 %v353
    %401 = vmatprep.subr.mxu0 %v352
    %402 = vmatpush1.msra.mxu0 %v351
    %403 = vmatprep.subr.mxu0 %v350
    %404 = vmatpush1.msra.mxu0 %v349
    %405 = vmatprep.subr.mxu0 %v348
    %406 = vmatpush1.msra.mxu0 %v347
    %407 = vmatprep.subr.mxu0 %v346
    %408 = vmatpush1.msra.mxu0 %v345
    %409 = vmatprep.subr.mxu0 0.0
    %410 = vmatpush2.msra.mxu0 0.0
    %411 = vmatprep.subr.mxu0 0.0
    %412 = vmatpush2.msra.mxu0 0.0
    %413 = vmatprep.subr.mxu0 0.0
    %414 = vmatpush2.msra.mxu0 0.0
    %415 = vmatprep.subr.mxu0 0.0
    %416 = vmatpush2.msra.mxu0 0.0
    %417 = vmatprep.subr.mxu0 0.0
    %418 = vmatpush2.msra.mxu0 0.0
    %419 = vmatprep.subr.mxu0 0.0
    %420 = vmatpush2.msra.mxu0 0.0
    %421 = vmatprep.subr.mxu0 0.0
    %422 = vmatpush2.msra.mxu0 0.0
    %423 = vmatprep.subr.mxu0 0.0
    %424 = vmatpush2.msra.mxu0 0.0
    %425 = vmatprep.subr.mxu0 0.0
    %426 = vmatpush2.msra.mxu0 0.0
    %427 = vmatprep.subr.mxu0 0.0
    %428 = vmatpush2.msra.mxu0 0.0
    %429 = vmatprep.subr.mxu0 0.0
    %430 = vmatpush2.msra.mxu0 0.0
    %431 = vmatprep.subr.mxu0 0.0
    %432 = vmatpush2.msra.mxu0 0.0
    %433 = vmatprep.subr.mxu0 0.0
    %434 = vmatpush2.msra.mxu0 0.0
    %435 = vmatprep.subr.mxu0 0.0
    %436 = vmatpush2.msra.mxu0 0.0
    %437 = vmatprep.subr.mxu0 0.0
    %438 = vmatpush2.msra.mxu0 0.0
    %439 = vmatprep.subr.mxu0 0.0
    %440 = vmatpush2.msra.mxu0 0.0
    %441 = vmatprep.mubr.f32.mxu0 0.0
    %442 = vmatmul.mubr.f32.gmra.mxu0 1.0
    %v443 = vpop.f32.mrf.mxu0
    %v444 = vadd.f32 0.0, %v443
    %v445 = vpop.f32.mrf.mxu0
    %v446 = vadd.f32 0.0, %v445
    %447 = vdwg.mxu0
    %v448 = vmul.f32 %v341, 0.0078125
    %v449 = vmul.f32 %v343, 0.0078125
    %v450 = vmul.f32 %v444, 0.0078125
    %v451 = vmul.f32 %v446, 0.0078125
    %v452 = vmul.f32 %v448, %v448
    %v453 = vmul.f32 %v449, %v449
    %v454 = vsub.f32 %v450, %v452
    %v455 = vsub.f32 %v451, %v453
    %v456 = vmax.f32 %v454, 0.0
    %v457 = vmax.f32 %v455, 0.0
    %v458 = vadd.f32 %v456, 1e-05
    %v459 = vadd.f32 %v457, 1e-05
    %v460 = vrsqrt.pop %v458
    %v461 = vrsqrt.pop %v459
    %v462 = vld [vmem:[%s2] sm:$0x3]
    %v464 = vlaneseq
    %v465 = vshrl.u32 %v464, 7
    %v466 = vsub.s32 0, %v465
    %v467 = vrot.slane %v462, %v466
    %v468 = vlaneseq
    %v469 = vshrl.u32 %v468, 7
    %v470 = vsub.s32 1, %v469
    %v471 = vrot.slane %v462, %v470
    %v474 = vmul.f32 %v460, %v467
    %v475 = vmul.f32 %v461, %v471
    %v476 = vld [vmem:[%s3] sm:$0x3]
    %v477 = vmul.f32 %v448, %v474
    %v478 = vmul.f32 %v449, %v475
    %v481 = vcombine.low %v477, %v478
    %v483 = vunpack.c.l.s4 1966171168
    %v484 = vunpack.c.0.s8 %v483
    %v485 = vlaneseq
    %v486 = vshrl.u32 %v485, 7
    %v487 = vsub.s32 %v484, %v486
    %v488 = vrot.slane %v481, %v487
    %v490 = vunpack.c.l.s4 1966171168
    %v491 = vunpack.c.0.s8 %v490
    %v492 = vlaneseq
    %v493 = vshrl.u32 %v492, 7
    %v494 = vsub.s32 %v491, %v493
    %v495 = vrot.slane %v488, %v494
    %v497 = vsub.f32 %v476, %v495
    %v498 = vlaneseq
    %v499 = vshrl.u32 %v498, 7
    %v500 = vsub.s32 0, %v499
    %v501 = vrot.slane %v474, %v500
    %v502 = vlaneseq
    %v503 = vshrl.u32 %v502, 7
    %v504 = vsub.s32 0, %v503
    %v505 = vrot.slane %v475, %v504
    %v506 = vmul.f32 %v180, %v501
    %v507 = vmul.f32 %v182, %v505
    %v508 = vmul.f32 %v186, %v501
    %v509 = vmul.f32 %v188, %v505
    %v510 = vmul.f32 %v192, %v501
    %v511 = vmul.f32 %v194, %v505
    %v512 = vmul.f32 %v198, %v501
    %v513 = vmul.f32 %v200, %v505
    %v514 = vmul.f32 %v204, %v501
    %v515 = vmul.f32 %v206, %v505
    %v516 = vmul.f32 %v210, %v501
    %v517 = vmul.f32 %v212, %v505
    %v518 = vmul.f32 %v216, %v501
    %v519 = vmul.f32 %v218, %v505
    %v520 = vmul.f32 %v222, %v501
    %v521 = vmul.f32 %v224, %v505
    %v522 = vmul.f32 %v228, %v501
    %v523 = vmul.f32 %v230, %v505
    %v524 = vmul.f32 %v234, %v501
    %v525 = vmul.f32 %v236, %v505
    %v526 = vmul.f32 %v240, %v501
    %v527 = vmul.f32 %v242, %v505
    %v528 = vmul.f32 %v246, %v501
    %v529 = vmul.f32 %v248, %v505
    %v530 = vmul.f32 %v252, %v501
    %v531 = vmul.f32 %v254, %v505
    %v532 = vmul.f32 %v258, %v501
    %v533 = vmul.f32 %v260, %v505
    %v534 = vmul.f32 %v264, %v501
    %v535 = vmul.f32 %v266, %v505
    %v536 = vmul.f32 %v270, %v501
    %v537 = vmul.f32 %v272, %v505
    %v539 = vlaneseq
    %v540 = vshrl.u32 %v539, 7
    %v541 = vsub.s32 0, %v540
    %v542 = vrot.slane %v497, %v541
    %v543 = vlaneseq
    %v544 = vshrl.u32 %v543, 7
    %v545 = vsub.s32 1, %v544
    %v546 = vrot.slane %v497, %v545
    %v549 = vadd.f32 %v506, %v542
    %v550 = vadd.f32 %v507, %v546
    %v551 = vadd.f32 %v508, %v542
    %v552 = vadd.f32 %v509, %v546
    %v553 = vadd.f32 %v510, %v542
    %v554 = vadd.f32 %v511, %v546
    %v555 = vadd.f32 %v512, %v542
    %v556 = vadd.f32 %v513, %v546
    %v557 = vadd.f32 %v514, %v542
    %v558 = vadd.f32 %v515, %v546
    %v559 = vadd.f32 %v516, %v542
    %v560 = vadd.f32 %v517, %v546
    %v561 = vadd.f32 %v518, %v542
    %v562 = vadd.f32 %v519, %v546
    %v563 = vadd.f32 %v520, %v542
    %v564 = vadd.f32 %v521, %v546
    %v565 = vadd.f32 %v522, %v542
    %v566 = vadd.f32 %v523, %v546
    %v567 = vadd.f32 %v524, %v542
    %v568 = vadd.f32 %v525, %v546
    %v569 = vadd.f32 %v526, %v542
    %v570 = vadd.f32 %v527, %v546
    %v571 = vadd.f32 %v528, %v542
    %v572 = vadd.f32 %v529, %v546
    %v573 = vadd.f32 %v530, %v542
    %v574 = vadd.f32 %v531, %v546
    %v575 = vadd.f32 %v532, %v542
    %v576 = vadd.f32 %v533, %v546
    %v577 = vadd.f32 %v534, %v542
    %v578 = vadd.f32 %v535, %v546
    %v579 = vadd.f32 %v536, %v542
    %v580 = vadd.f32 %v537, %v546
    %v581 = vmax.f32 %v549, 0.0
    %v582 = vmax.f32 %v550, 0.0
    %v583 = vmax.f32 %v551, 0.0
    %v584 = vmax.f32 %v552, 0.0
    %v585 = vmax.f32 %v553, 0.0
    %v586 = vmax.f32 %v554, 0.0
    %v587 = vmax.f32 %v555, 0.0
    %v588 = vmax.f32 %v556, 0.0
    %v589 = vmax.f32 %v557, 0.0
    %v590 = vmax.f32 %v558, 0.0
    %v591 = vmax.f32 %v559, 0.0
    %v592 = vmax.f32 %v560, 0.0
    %v593 = vmax.f32 %v561, 0.0
    %v594 = vmax.f32 %v562, 0.0
    %v595 = vmax.f32 %v563, 0.0
    %v596 = vmax.f32 %v564, 0.0
    %v597 = vmax.f32 %v565, 0.0
    %v598 = vmax.f32 %v566, 0.0
    %v599 = vmax.f32 %v567, 0.0
    %v600 = vmax.f32 %v568, 0.0
    %v601 = vmax.f32 %v569, 0.0
    %v602 = vmax.f32 %v570, 0.0
    %v603 = vmax.f32 %v571, 0.0
    %v604 = vmax.f32 %v572, 0.0
    %v605 = vmax.f32 %v573, 0.0
    %v606 = vmax.f32 %v574, 0.0
    %v607 = vmax.f32 %v575, 0.0
    %v608 = vmax.f32 %v576, 0.0
    %v609 = vmax.f32 %v577, 0.0
    %v610 = vmax.f32 %v578, 0.0
    %v611 = vmax.f32 %v579, 0.0
    %v612 = vmax.f32 %v580, 0.0
    %v613 = vld [vmem:[#allocation7] sm:$0xff]
    %v614 = vld [vmem:[#allocation7 + $0x8] sm:$0xff]
    %v615 = vld [vmem:[#allocation7 + $0x10] sm:$0xff]
    %v616 = vld [vmem:[#allocation7 + $0x18] sm:$0xff]
    %v617 = vld [vmem:[#allocation7 + $0x20] sm:$0xff]
    %v618 = vld [vmem:[#allocation7 + $0x28] sm:$0xff]
    %v619 = vld [vmem:[#allocation7 + $0x30] sm:$0xff]
    %v620 = vld [vmem:[#allocation7 + $0x38] sm:$0xff]
    %v621 = vld [vmem:[#allocation7 + $0x40] sm:$0xff]
    %v622 = vld [vmem:[#allocation7 + $0x48] sm:$0xff]
    %v623 = vld [vmem:[#allocation7 + $0x50] sm:$0xff]
    %v624 = vld [vmem:[#allocation7 + $0x58] sm:$0xff]
    %v625 = vld [vmem:[#allocation7 + $0x60] sm:$0xff]
    %v626 = vld [vmem:[#allocation7 + $0x68] sm:$0xff]
    %v627 = vld [vmem:[#allocation7 + $0x70] sm:$0xff]
    %v628 = vld [vmem:[#allocation7 + $0x78] sm:$0xff]
    %v629 = vld [vmem:[#allocation7 + $0x80] sm:$0xff]
    %v630 = vld [vmem:[#allocation7 + $0x88] sm:$0xff]
    %v631 = vld [vmem:[#allocation7 + $0x90] sm:$0xff]
    %v632 = vld [vmem:[#allocation7 + $0x98] sm:$0xff]
    %v633 = vld [vmem:[#allocation7 + $0xa0] sm:$0xff]
    %v634 = vld [vmem:[#allocation7 + $0xa8] sm:$0xff]
    %v635 = vld [vmem:[#allocation7 + $0xb0] sm:$0xff]
    %v636 = vld [vmem:[#allocation7 + $0xb8] sm:$0xff]
    %v637 = vld [vmem:[#allocation7 + $0xc0] sm:$0xff]
    %v638 = vld [vmem:[#allocation7 + $0xc8] sm:$0xff]
    %v639 = vld [vmem:[#allocation7 + $0xd0] sm:$0xff]
    %v640 = vld [vmem:[#allocation7 + $0xd8] sm:$0xff]
    %v641 = vld [vmem:[#allocation7 + $0xe0] sm:$0xff]
    %v642 = vld [vmem:[#allocation7 + $0xe8] sm:$0xff]
    %v643 = vld [vmem:[#allocation7 + $0xf0] sm:$0xff]
    %v644 = vld [vmem:[#allocation7 + $0xf8] sm:$0xff]
    %v645 = vld [vmem:[%s5] sm:$0x1]
    %v647 = vlaneseq
    %v648 = vshrl.u32 %v647, 7
    %v649 = vsub.s32 0, %v648
    %v650 = vrot.slane %v645, %v649
    %652 = vmatprep.subr.mxu0 0.0
    %653 = vmatpush1.msra.mxu0 %v628
    %654 = vmatprep.subr.mxu0 0.0
    %655 = vmatpush1.msra.mxu0 %v627
    %656 = vmatprep.subr.mxu0 0.0
    %657 = vmatpush1.msra.mxu0 %v626
    %658 = vmatprep.subr.mxu0 0.0
    %659 = vmatpush1.msra.mxu0 %v625
    %660 = vmatprep.subr.mxu0 0.0
    %661 = vmatpush1.msra.mxu0 %v624
    %662 = vmatprep.subr.mxu0 0.0
    %663 = vmatpush1.msra.mxu0 %v623
    %664 = vmatprep.subr.mxu0 0.0
    %665 = vmatpush1.msra.mxu0 %v622
    %666 = vmatprep.subr.mxu0 0.0
    %667 = vmatpush1.msra.mxu0 %v621
    %668 = vmatprep.subr.mxu0 0.0
    %669 = vmatpush1.msra.mxu0 %v620
    %670 = vmatprep.subr.mxu0 0.0
    %671 = vmatpush1.msra.mxu0 %v619
    %672 = vmatprep.subr.mxu0 0.0
    %673 = vmatpush1.msra.mxu0 %v618
    %674 = vmatprep.subr.mxu0 0.0
    %675 = vmatpush1.msra.mxu0 %v617
    %676 = vmatprep.subr.mxu0 0.0
    %677 = vmatpush1.msra.mxu0 %v616
    %678 = vmatprep.subr.mxu0 0.0
    %679 = vmatpush1.msra.mxu0 %v615
    %680 = vmatprep.subr.mxu0 0.0
    %681 = vmatpush1.msra.mxu0 %v614
    %682 = vmatprep.subr.mxu0 0.0
    %683 = vmatpush1.msra.mxu0 %v613
    %684 = vmatprep.subr.mxu0 0.0
    %685 = vmatpush2.msra.mxu0 %v644
    %686 = vmatprep.subr.mxu0 0.0
    %687 = vmatpush2.msra.mxu0 %v643
    %688 = vmatprep.subr.mxu0 0.0
    %689 = vmatpush2.msra.mxu0 %v642
    %690 = vmatprep.subr.mxu0 0.0
    %691 = vmatpush2.msra.mxu0 %v641
    %692 = vmatprep.subr.mxu0 0.0
    %693 = vmatpush2.msra.mxu0 %v640
    %694 = vmatprep.subr.mxu0 0.0
    %695 = vmatpush2.msra.mxu0 %v639
    %696 = vmatprep.subr.mxu0 0.0
    %697 = vmatpush2.msra.mxu0 %v638
    %698 = vmatprep.subr.mxu0 0.0
    %699 = vmatpush2.msra.mxu0 %v637
    %700 = vmatprep.subr.mxu0 0.0
    %701 = vmatpush2.msra.mxu0 %v636
    %702 = vmatprep.subr.mxu0 0.0
    %703 = vmatpush2.msra.mxu0 %v635
    %704 = vmatprep.subr.mxu0 0.0
    %705 = vmatpush2.msra.mxu0 %v634
    %706 = vmatprep.subr.mxu0 0.0
    %707 = vmatpush2.msra.mxu0 %v633
    %708 = vmatprep.subr.mxu0 0.0
    %709 = vmatpush2.msra.mxu0 %v632
    %710 = vmatprep.subr.mxu0 0.0
    %711 = vmatpush2.msra.mxu0 %v631
    %712 = vmatprep.subr.mxu0 0.0
    %713 = vmatpush2.msra.mxu0 %v630
    %714 = vmatprep.subr.mxu0 0.0
    %715 = vmatpush2.msra.mxu0 %v629
    %716 = vmatprep.mubr.f32.mxu0 %v582
    %717 = vmatmul.mubr.f32.gmra.mxu0 %v581
    %v718 = vpop.f32.mrf.mxu0
    %v719 = vadd.f32 %v650, %v718
    %v720 = vpop.f32.mrf.mxu0
    %721 = vmatprep.mubr.f32.mxu0 %v584
    %722 = vmatmul.mubr.f32.gmra.mxu0 %v583
    %v723 = vpop.f32.mrf.mxu0
    %v724 = vadd.f32 %v650, %v723
    %v725 = vpop.f32.mrf.mxu0
    %726 = vmatprep.mubr.f32.mxu0 %v586
    %727 = vmatmul.mubr.f32.gmra.mxu0 %v585
    %v728 = vpop.f32.mrf.mxu0
    %v729 = vadd.f32 %v650, %v728
    %v730 = vpop.f32.mrf.mxu0
    %731 = vmatprep.mubr.f32.mxu0 %v588
    %732 = vmatmul.mubr.f32.gmra.mxu0 %v587
    %v733 = vpop.f32.mrf.mxu0
    %v734 = vadd.f32 %v650, %v733
    %v735 = vpop.f32.mrf.mxu0
    %736 = vmatprep.mubr.f32.mxu0 %v590
    %737 = vmatmul.mubr.f32.gmra.mxu0 %v589
    %v738 = vpop.f32.mrf.mxu0
    %v739 = vadd.f32 %v650, %v738
    %v740 = vpop.f32.mrf.mxu0
    %741 = vmatprep.mubr.f32.mxu0 %v592
    %742 = vmatmul.mubr.f32.gmra.mxu0 %v591
    %v743 = vpop.f32.mrf.mxu0
    %v744 = vadd.f32 %v650, %v743
    %v745 = vpop.f32.mrf.mxu0
    %746 = vmatprep.mubr.f32.mxu0 %v594
    %747 = vmatmul.mubr.f32.gmra.mxu0 %v593
    %v748 = vpop.f32.mrf.mxu0
    %v749 = vadd.f32 %v650, %v748
    %v750 = vpop.f32.mrf.mxu0
    %751 = vmatprep.mubr.f32.mxu0 %v596
    %752 = vmatmul.mubr.f32.gmra.mxu0 %v595
    %v753 = vpop.f32.mrf.mxu0
    %v754 = vadd.f32 %v650, %v753
    %v755 = vpop.f32.mrf.mxu0
    %756 = vmatprep.mubr.f32.mxu0 %v598
    %757 = vmatmul.mubr.f32.gmra.mxu0 %v597
    %v758 = vpop.f32.mrf.mxu0
    %v759 = vadd.f32 %v650, %v758
    %v760 = vpop.f32.mrf.mxu0
    %761 = vmatprep.mubr.f32.mxu0 %v600
    %762 = vmatmul.mubr.f32.gmra.mxu0 %v599
    %v763 = vpop.f32.mrf.mxu0
    %v764 = vadd.f32 %v650, %v763
    %v765 = vpop.f32.mrf.mxu0
    %766 = vmatprep.mubr.f32.mxu0 %v602
    %767 = vmatmul.mubr.f32.gmra.mxu0 %v601
    %v768 = vpop.f32.mrf.mxu0
    %v769 = vadd.f32 %v650, %v768
    %v770 = vpop.f32.mrf.mxu0
    %771 = vmatprep.mubr.f32.mxu0 %v604
    %772 = vmatmul.mubr.f32.gmra.mxu0 %v603
    %v773 = vpop.f32.mrf.mxu0
    %v774 = vadd.f32 %v650, %v773
    %v775 = vpop.f32.mrf.mxu0
    %776 = vmatprep.mubr.f32.mxu0 %v606
    %777 = vmatmul.mubr.f32.gmra.mxu0 %v605
    %v778 = vpop.f32.mrf.mxu0
    %v779 = vadd.f32 %v650, %v778
    %v780 = vpop.f32.mrf.mxu0
    %781 = vmatprep.mubr.f32.mxu0 %v608
    %782 = vmatmul.mubr.f32.gmra.mxu0 %v607
    %v783 = vpop.f32.mrf.mxu0
    %v784 = vadd.f32 %v650, %v783
    %v785 = vpop.f32.mrf.mxu0
    %786 = vmatprep.mubr.f32.mxu0 %v610
    %787 = vmatmul.mubr.f32.gmra.mxu0 %v609
    %v788 = vpop.f32.mrf.mxu0
    %v789 = vadd.f32 %v650, %v788
    %v790 = vpop.f32.mrf.mxu0
    %791 = vmatprep.mubr.f32.mxu0 %v612
    %792 = vmatmul.mubr.f32.gmra.mxu0 %v611
    %v793 = vpop.f32.mrf.mxu0
    %v794 = vadd.f32 %v650, %v793
    %v795 = vpop.f32.mrf.mxu0
    %796 = vdwg.mxu0
    %797 = vst [vmem:[#allocation8] sm:$0xff] %v719
    %798 = vst [vmem:[#allocation8 + $0x8] sm:$0xff] %v724
    %799 = vst [vmem:[#allocation8 + $0x10] sm:$0xff] %v729
    %800 = vst [vmem:[#allocation8 + $0x18] sm:$0xff] %v734
    %801 = vst [vmem:[#allocation8 + $0x20] sm:$0xff] %v739
    %802 = vst [vmem:[#allocation8 + $0x28] sm:$0xff] %v744
    %803 = vst [vmem:[#allocation8 + $0x30] sm:$0xff] %v749
    %804 = vst [vmem:[#allocation8 + $0x38] sm:$0xff] %v754
    %805 = vst [vmem:[#allocation8 + $0x40] sm:$0xff] %v759
    %806 = vst [vmem:[#allocation8 + $0x48] sm:$0xff] %v764
    %807 = vst [vmem:[#allocation8 + $0x50] sm:$0xff] %v769
    %808 = vst [vmem:[#allocation8 + $0x58] sm:$0xff] %v774
    %809 = vst [vmem:[#allocation8 + $0x60] sm:$0xff] %v779
    %810 = vst [vmem:[#allocation8 + $0x68] sm:$0xff] %v784
    %811 = vst [vmem:[#allocation8 + $0x70] sm:$0xff] %v789
    %812 = vst [vmem:[#allocation8 + $0x78] sm:$0xff] %v794
    // Predicated region
    $region38: #{tpu_custom_call.1} parent=1 // pred_check
      _
    $region39: #{tpu_custom_call.1} parent=1 // pred_check_branch
      %814 = sbr.rel (0) target = $region41
    $region40: #{tpu_custom_call.1} parent=1 // pred_region
      %s816 = ssub.s32 2048, 2048
      %817 = vsyncadd [#allocation4], %s816
      %s818 = sshll.u32 [#allocation8], 4
      %s819 = int_to_ptr.vmem [resolvable:$true] %s818
      %824 = dma.vmem_to_hbm [thread:$0]  %s819, 2048, %s6, [#allocation4], 128, 128, 8
    $region41: #{tpu_custom_call.1} parent=1 // pred_fallthru
      _
    // Predicated region
    $region42: #{tpu_custom_call.1} parent=1 // pred_check
      _
    $region43: #{tpu_custom_call.1} parent=1 // pred_check_branch
      %826 = sbr.rel (0) target = $region45
    $region44: #{tpu_custom_call.1} parent=1 // pred_region
      %827 = dma.done [#allocation4], 2048
    $region45: #{tpu_custom_call.1} parent=1 // pred_fallthru
      _
    %828 = vsyncpa [#allocation3], 1
    %829 = vsyncpa [#allocation6], 1
    %830 = vsyncpa [#allocation4], 1

</llo_original>
